<compile_context>
chip_gen: v5e
topology: v5e:2x2
jax: 0.10.0
libtpu: 0.0.40
codegen_flags: <defaults>
</compile_context>

<pallas_src>
import jax
import jax.numpy as jnp
from jax.experimental import pallas as pl
from jax.experimental.pallas import tpu as pltpu


def _attn_pool_kernel(x_ref, mask_ref, wa_ref, ba_ref, w_ref, bw_ref,
                      utter_ref, attw_ref):
    # x_ref:    (Bb, T, H)  block of batch_rep (bf16 preferred)
    # mask_ref: (Bb, T)     additive attention mask (f32)
    # wa_ref:   (H, H)      W_a weight, transposed to (in, out), bf16
    # ba_ref:   (1, H)      W_a bias (f32)
    # w_ref:    (1, H)      W weight row (f32)
    # bw_ref:   (1,)        W bias scalar, SMEM (f32)
    # utter_ref:(Bb, H)     pooled output
    # attw_ref: (Bb, T)     attention weights (expanded to (B, T, 1) outside)
    bb, t, h_dim = x_ref.shape

    x = x_ref[...]                                      # (Bb, T, H)
    x2 = x.reshape(bb * t, h_dim)                       # free: last dim unchanged
    if x2.dtype != jnp.bfloat16:
        x2 = x2.astype(jnp.bfloat16)                    # MXU operand only

    # hidden = ReLU(x @ W_a^T + b_a): bf16 MXU operands, f32 accumulation.
    hidden = jnp.dot(x2, wa_ref[...],
                     preferred_element_type=jnp.float32)        # (Bb*T, H) f32
    hidden = jnp.maximum(hidden + ba_ref[...], 0.0)
    hidden3 = hidden.reshape(bb, t, h_dim)                      # free

    # att_logits = <hidden, w> + b_W + mask  (VPU mul + lane reduce, no transpose)
    logits = jnp.sum(hidden3 * w_ref[...], axis=-1)             # (Bb, T) f32
    logits = logits + bw_ref[0] + mask_ref[...]

    # numerically-stable softmax over T (lanes)
    m = jnp.max(logits, axis=-1, keepdims=True)
    e = jnp.exp(logits - m)
    denom = jnp.sum(e, axis=-1, keepdims=True)                  # (Bb, 1)
    inv = pl.reciprocal(denom, approx=True)                     # EUP slot
    inv = inv * (2.0 - denom * inv)                             # Newton -> ~f32 exact
    att = e * inv                                               # (Bb, T) f32
    attw_ref[...] = att.astype(attw_ref.dtype)

    # utter_rep[b] = sum_t att[b, t] * x[b, t, :]  -- VPU mul + reduce over T
    # (f32 accumulation; bf16 x is promoted inside the fused multiply).
    pooled = jnp.sum(att[..., None] * x, axis=1)                # (Bb, H) f32
    utter_ref[...] = pooled.astype(utter_ref.dtype)


def _tpu_generation_params():
    """(vmem_limit_bytes, block_budget_bytes, num_tensorcores) for this chip."""
    vmem_cap, num_cores = 64 * 1024 * 1024, 1          # conservative default
    try:
        kind = jax.devices()[0].device_kind.lower()
        if ("v5" in kind) or ("v6" in kind):
            vmem_cap, num_cores = 128 * 1024 * 1024, 1  # 128 MiB VMEM, single TC
        elif "7" in kind:
            vmem_cap, num_cores = 64 * 1024 * 1024, 2   # 64 MiB per TC, 2 TCs
    except Exception:
        pass
    vmem_limit = min((vmem_cap * 3) // 4, 112 * 1024 * 1024)   # 48 MiB / 96 MiB
    budget = vmem_limit - 8 * 1024 * 1024                      # 40 MiB / 88 MiB
    return vmem_limit, budget, num_cores


def _pick_block_b(B, T, H, budget_bytes, num_cores=1, x_itemsize=2):
    """Largest batch block whose total live VMEM (double-buffered pipeline tiles
    + single-buffered weights + in-kernel intermediates) fits the budget.
    Prefers sublane-aligned blocks (multiples of 8, or the whole batch) and,
    on multi-TensorCore parts, grid lengths that divide evenly across cores."""
    weight_bytes = H * H * 2 + 2 * H * 4     # single-buffered bf16 Wa^T + f32 vecs

    def per_step(bb):
        pipeline = 2 * (bb * T * H * x_itemsize   # batch_rep block (in)
                        + bb * T * 4              # mask (in)
                        + bb * H * 4              # utter (out)
                        + bb * T * 4)             # att_w (out)
        # in-kernel intermediates: f32 hidden slab + f32 pooling product
        # + slack for a bf16 reshape/cast copy of x.
        interm = bb * T * H * (4 + 4 + 2)
        return pipeline + interm

    divisors = [d for d in range(1, B + 1) if B % d == 0]
    aligned = [d for d in divisors if d % 8 == 0 or d == B]
    fitting = [d for d in aligned if weight_bytes + per_step(d) <= budget_bytes]
    if not fitting:
        fitting = [d for d in divisors
                   if weight_bytes + per_step(d) <= budget_bytes]
    if not fitting:
        return 1
    if num_cores > 1:
        balanced = [d for d in fitting if (B // d) % num_cores == 0]
        if balanced:
            return max(balanced)
    return max(fitting)


def attentive_pooling(batch_rep, att_mask, wa_weight, wa_bias, w_weight, w_bias,
                      *, block_b=None, vmem_limit_bytes=None):
    """batch_rep: (B,T,H), ideally bf16; att_mask: (B,T) additive mask.
    wa_weight: (H,H) torch layout (out,in); wa_bias: (H,);
    w_weight: (1,H); w_bias: (1,). Returns (utter_rep (B,H), att_w (B,T,1))."""
    B, T, H = batch_rep.shape
    out_dtype = batch_rep.dtype

    gen_vmem_limit, budget, num_cores = _tpu_generation_params()
    if vmem_limit_bytes is None:
        vmem_limit_bytes = gen_vmem_limit
    if block_b is None:
        block_b = _pick_block_b(B, T, H, budget, num_cores,
                                x_itemsize=batch_rep.dtype.itemsize)
    assert B % block_b == 0, "block_b must divide the batch size"
    grid = (B // block_b,)

    att_mask = att_mask.astype(jnp.float32)
    wa_t = wa_weight.T.astype(jnp.bfloat16)            # (in, out), bf16 MXU operand
    ba = wa_bias.reshape(1, H).astype(jnp.float32)
    w_row = w_weight.reshape(1, H).astype(jnp.float32)
    bw = w_bias.reshape(1).astype(jnp.float32)         # scalar -> SMEM

    itemsize = batch_rep.dtype.itemsize
    cost = pl.CostEstimate(
        flops=2 * B * T * H * (H + 2),
        transcendentals=B * T + B,
        bytes_accessed=(B * T * H * itemsize          # batch_rep in
                        + H * H * 2                   # Wa (bf16)
                        + (2 * H + 1) * 4             # ba, w, bw
                        + B * T * 4                   # mask in
                        + B * H * itemsize            # utter out
                        + B * T * 4),                 # att_w out
    )

    single = pl.Buffered(buffer_count=1)               # grid-invariant operands

    utter_rep, att_w = pl.pallas_call(
        _attn_pool_kernel,
        out_shape=(
            jax.ShapeDtypeStruct((B, H), out_dtype),
            jax.ShapeDtypeStruct((B, T), jnp.float32),
        ),
        grid_spec=pltpu.PrefetchScalarGridSpec(
            num_scalar_prefetch=0,
            grid=grid,
            in_specs=[
                pl.BlockSpec((block_b, T, H), lambda b: (b, 0, 0)),   # batch_rep
                pl.BlockSpec((block_b, T), lambda b: (b, 0)),         # att_mask
                pl.BlockSpec((H, H), lambda b: (0, 0),
                             pipeline_mode=single),                   # W_a^T (bf16)
                pl.BlockSpec((1, H), lambda b: (0, 0),
                             pipeline_mode=single),                   # b_a
                pl.BlockSpec((1, H), lambda b: (0, 0),
                             pipeline_mode=single),                   # W row
                pl.BlockSpec(memory_space=pltpu.MemorySpace.SMEM),    # b_W scalar
            ],
            out_specs=[
                pl.BlockSpec((block_b, H), lambda b: (b, 0)),         # utter_rep
                pl.BlockSpec((block_b, T), lambda b: (b, 0)),         # att_w
            ],
        ),
        compiler_params=pltpu.CompilerParams(
            dimension_semantics=("parallel",),
            vmem_limit_bytes=vmem_limit_bytes,
        ),
        cost_estimate=cost,
    )(batch_rep, att_mask, wa_t, ba, w_row, bw)

    return utter_rep, att_w[..., None]                 # att_w -> (B, T, 1)


def _reference(batch_rep, att_mask, wa_weight, wa_bias, w_weight, w_bias):
    h = jnp.maximum(jnp.einsum('bth,oh->bto', batch_rep, wa_weight) + wa_bias, 0.0)
    logits = jnp.einsum('bth,oh->bto', h, w_weight)[..., 0] + w_bias[0]
    logits = logits + att_mask
    att_w = jax.nn.softmax(logits, axis=-1)[..., None]
    utter = jnp.sum(batch_rep * att_w, axis=1)
    return utter, att_w


if __name__ == "__main__":
    B, T, H = 2, 8, 32
    key = jax.random.PRNGKey(0)
    k1, k2, k3, k4, k5 = jax.random.split(key, 5)

    # bf16 end-to-end for the dominant HBM stream (the kernel also accepts f32).
    batch_rep = jax.random.normal(k1, (B, T, H), dtype=jnp.float32).astype(jnp.bfloat16)
    # additive mask: 0 for valid, -1e9 for masked (last 2 steps of batch 1)
    att_mask = jnp.zeros((B, T), dtype=jnp.float32)
    att_mask = att_mask.at[1, -2:].set(-1e9)

    # nn.Linear-shaped parameters: weight (out, in), bias (out,)
    wa_weight = jax.random.normal(k2, (H, H), dtype=jnp.float32) * 0.1
    wa_bias = jax.random.normal(k3, (H,), dtype=jnp.float32) * 0.1
    w_weight = jax.random.normal(k4, (1, H), dtype=jnp.float32) * 0.1
    w_bias = jax.random.normal(k5, (1,), dtype=jnp.float32) * 0.1

    utter_rep, att_w = attentive_pooling(
        batch_rep, att_mask, wa_weight, wa_bias, w_weight, w_bias)
    utter_rep = jax.block_until_ready(utter_rep)
    att_w = jax.block_until_ready(att_w)

    # f32 reference computed on the same (bf16-rounded) input values.
    ref_utter, ref_att = _reference(
        batch_rep.astype(jnp.float32), att_mask, wa_weight, wa_bias,
        w_weight, w_bias)

    assert utter_rep.shape == (B, H)
    assert att_w.shape == (B, T, 1)
    # bf16 MXU operands + bf16 input/output -> relaxed (vs f32-exact) tolerances.
    assert jnp.allclose(att_w, ref_att, atol=5e-3, rtol=1e-2), \
        float(jnp.max(jnp.abs(att_w - ref_att)))
    assert jnp.allclose(utter_rep.astype(jnp.float32), ref_utter,
                        atol=3e-2, rtol=3e-2), \
        float(jnp.max(jnp.abs(utter_rep.astype(jnp.float32) - ref_utter)))

    print("KERNEL_OK")
</pallas_src>

<mosaic_0001>
module attributes {stable_mosaic.version = 11 : i64} {
  func.func @_attn_pool_kernel(%arg0: i32, %arg1: memref<2x8x32xbf16, #tpu.memory_space<vmem>>, %arg2: memref<2x8xf32, #tpu.memory_space<vmem>>, %arg3: memref<32x32xbf16, #tpu.memory_space<vmem>>, %arg4: memref<1x32xf32, #tpu.memory_space<vmem>>, %arg5: memref<1x32xf32, #tpu.memory_space<vmem>>, %arg6: memref<1xf32, #tpu.memory_space<smem>>, %arg7: memref<2x32xbf16, #tpu.memory_space<vmem>>, %arg8: memref<2x8xf32, #tpu.memory_space<vmem>>) attributes {dimension_semantics = [#tpu.dimension_semantics<parallel>], iteration_bounds = array<i64: 1>, scalar_prefetch = 0 : i64, scratch_operands = 0 : i64, tpu.core_type = #tpu.core_type<tc>, window_params = [{transform_indices = @transform_0, window_bounds = array<i64: 2, 8, 32>}, {transform_indices = @transform_1, window_bounds = array<i64: 2, 8>}, {pipeline_mode = #tpu.pipeline_mode<synchronous>, transform_indices = @transform_2, window_bounds = array<i64: 32, 32>}, {pipeline_mode = #tpu.pipeline_mode<synchronous>, transform_indices = @transform_3, window_bounds = array<i64: 1, 32>}, {pipeline_mode = #tpu.pipeline_mode<synchronous>, transform_indices = @transform_4, window_bounds = array<i64: 1, 32>}, {transform_indices = @transform_5, window_bounds = array<i64: 1>}, {transform_indices = @transform_6, window_bounds = array<i64: 2, 32>}, {transform_indices = @transform_7, window_bounds = array<i64: 2, 8>}]} {
    %c0 = arith.constant 0 : index
    %c0_0 = arith.constant 0 : index
    %c0_1 = arith.constant 0 : index
    %0 = vector.load %arg1[%c0, %c0_0, %c0_1] : memref<2x8x32xbf16, #tpu.memory_space<vmem>>, vector<2x8x32xbf16>
    %1 = vector.shape_cast %0 : vector<2x8x32xbf16> to vector<16x32xbf16>
    %c0_2 = arith.constant 0 : index
    %c0_3 = arith.constant 0 : index
    %2 = vector.load %arg3[%c0_2, %c0_3] : memref<32x32xbf16, #tpu.memory_space<vmem>>, vector<32x32xbf16>
    %cst = arith.constant dense<0.000000e+00> : vector<16x32xf32>
    %3 = tpu.matmul %1, %2, %cst {dimension_numbers = #tpu.dot_dimension_numbers<[1], [0], [0], [1], [0, 0, 1, 1], [], []>} : vector<16x32xbf16>, vector<32x32xbf16>, vector<16x32xf32> -> vector<16x32xf32>
    %c0_4 = arith.constant 0 : index
    %c0_5 = arith.constant 0 : index
    %4 = vector.load %arg4[%c0_4, %c0_5] : memref<1x32xf32, #tpu.memory_space<vmem>>, vector<1x32xf32>
    %5 = vector.broadcast %4 : vector<1x32xf32> to vector<16x32xf32>
    %6 = arith.addf %3, %5 : vector<16x32xf32>
    %cst_6 = arith.constant 0.000000e+00 : f32
    %7 = vector.broadcast %cst_6 : f32 to vector<16x32xf32>
    %8 = arith.maximumf %6, %7 : vector<16x32xf32>
    %9 = vector.shape_cast %8 : vector<16x32xf32> to vector<2x8x32xf32>
    %c0_7 = arith.constant 0 : index
    %c0_8 = arith.constant 0 : index
    %10 = vector.load %arg5[%c0_7, %c0_8] : memref<1x32xf32, #tpu.memory_space<vmem>>, vector<1x32xf32>
    %11 = vector.shape_cast %10 : vector<1x32xf32> to vector<1x1x32xf32>
    %12 = vector.broadcast %11 : vector<1x1x32xf32> to vector<2x8x32xf32>
    %13 = arith.mulf %9, %12 : vector<2x8x32xf32>
    %cst_9 = arith.constant dense<0.000000e+00> : vector<2x8xf32>
    %14 = vector.multi_reduction <add>, %13, %cst_9 [2] : vector<2x8x32xf32> to vector<2x8xf32>
    %c0_10 = arith.constant 0 : index
    %15 = memref.load %arg6[%c0_10] : memref<1xf32, #tpu.memory_space<smem>>
    %16 = vector.broadcast %15 : f32 to vector<2x8xf32>
    %17 = arith.addf %14, %16 : vector<2x8xf32>
    %c0_11 = arith.constant 0 : index
    %c0_12 = arith.constant 0 : index
    %18 = vector.load %arg2[%c0_11, %c0_12] : memref<2x8xf32, #tpu.memory_space<vmem>>, vector<2x8xf32>
    %19 = arith.addf %17, %18 : vector<2x8xf32>
    %cst_13 = arith.constant dense<0xFF800000> : vector<2xf32>
    %20 = vector.multi_reduction <maximumf>, %19, %cst_13 [1] : vector<2x8xf32> to vector<2xf32>
    %21 = vector.shape_cast %20 : vector<2xf32> to vector<2x1xf32>
    %22 = vector.broadcast %21 : vector<2x1xf32> to vector<2x8xf32>
    %23 = arith.subf %19, %22 : vector<2x8xf32>
    %24 = math.exp %23 : vector<2x8xf32>
    %cst_14 = arith.constant dense<0.000000e+00> : vector<2xf32>
    %25 = vector.multi_reduction <add>, %24, %cst_14 [1] : vector<2x8xf32> to vector<2xf32>
    %26 = vector.shape_cast %25 : vector<2xf32> to vector<2x1xf32>
    %27 = tpu.reciprocal %26 {approx = true} : vector<2x1xf32> -> vector<2x1xf32>
    %28 = arith.mulf %26, %27 : vector<2x1xf32>
    %cst_15 = arith.constant 2.000000e+00 : f32
    %29 = vector.broadcast %cst_15 : f32 to vector<2x1xf32>
    %30 = arith.subf %29, %28 : vector<2x1xf32>
    %31 = arith.mulf %27, %30 : vector<2x1xf32>
    %32 = vector.broadcast %31 : vector<2x1xf32> to vector<2x8xf32>
    %33 = arith.mulf %24, %32 : vector<2x8xf32>
    %c0_16 = arith.constant 0 : index
    %c0_17 = arith.constant 0 : index
    %34 = vector.load %arg8[%c0_16, %c0_17] : memref<2x8xf32, #tpu.memory_space<vmem>>, vector<2x8xf32>
    tpu.vector_store %arg8[%c0_16, %c0_17], %33 {strides = array<i32>} : memref<2x8xf32, #tpu.memory_space<vmem>>, vector<2x8xf32>,
    %35 = vector.shape_cast %33 : vector<2x8xf32> to vector<2x8x1xf32>
    %36 = arith.extf %0 : vector<2x8x32xbf16> to vector<2x8x32xf32>
    %37 = vector.broadcast %35 : vector<2x8x1xf32> to vector<2x8x32xf32>
    %38 = arith.mulf %37, %36 : vector<2x8x32xf32>
    %cst_18 = arith.constant dense<0.000000e+00> : vector<2x32xf32>
    %39 = vector.multi_reduction <add>, %38, %cst_18 [1] : vector<2x8x32xf32> to vector<2x32xf32>
    %40 = arith.truncf %39 : vector<2x32xf32> to vector<2x32xbf16>
    %c0_19 = arith.constant 0 : index
    %c0_20 = arith.constant 0 : index
    %41 = vector.load %arg7[%c0_19, %c0_20] : memref<2x32xbf16, #tpu.memory_space<vmem>>, vector<2x32xbf16>
    tpu.vector_store %arg7[%c0_19, %c0_20], %40 {strides = array<i32>} : memref<2x32xbf16, #tpu.memory_space<vmem>>, vector<2x32xbf16>,
    return
  }
  func.func @transform_0(%arg0: i32) -> (i32, i32, i32) {
    %c0_i32 = arith.constant 0 : i32
    %c0_i32_0 = arith.constant 0 : i32
    %c0_i32_1 = arith.constant 0 : i32
    return %arg0, %c0_i32, %c0_i32_0 : i32, i32, i32
  }
  func.func @transform_1(%arg0: i32) -> (i32, i32) {
    %c0_i32 = arith.constant 0 : i32
    %c0_i32_0 = arith.constant 0 : i32
    return %arg0, %c0_i32 : i32, i32
  }
  func.func @transform_2(%arg0: i32) -> (i32, i32) {
    %c0_i32 = arith.constant 0 : i32
    %c0_i32_0 = arith.constant 0 : i32
    %c0_i32_1 = arith.constant 0 : i32
    return %c0_i32, %c0_i32_0 : i32, i32
  }
  func.func @transform_3(%arg0: i32) -> (i32, i32) {
    %c0_i32 = arith.constant 0 : i32
    %c0_i32_0 = arith.constant 0 : i32
    %c0_i32_1 = arith.constant 0 : i32
    return %c0_i32, %c0_i32_0 : i32, i32
  }
  func.func @transform_4(%arg0: i32) -> (i32, i32) {
    %c0_i32 = arith.constant 0 : i32
    %c0_i32_0 = arith.constant 0 : i32
    %c0_i32_1 = arith.constant 0 : i32
    return %c0_i32, %c0_i32_0 : i32, i32
  }
  func.func @transform_5(%arg0: i32) -> i32 {
    %c0_i32 = arith.constant 0 : i32
    %c0_i32_0 = arith.constant 0 : i32
    return %c0_i32 : i32
  }
  func.func @transform_6(%arg0: i32) -> (i32, i32) {
    %c0_i32 = arith.constant 0 : i32
    %c0_i32_0 = arith.constant 0 : i32
    return %arg0, %c0_i32 : i32, i32
  }
  func.func @transform_7(%arg0: i32) -> (i32, i32) {
    %c0_i32 = arith.constant 0 : i32
    %c0_i32_0 = arith.constant 0 : i32
    return %arg0, %c0_i32 : i32, i32
  }
}

</mosaic_0001>

<llo_original>
// kernel: tpu_custom_call.1
$region0: #{tpu_custom_call.1}
  #allocation0 [shape = 'u32[]', space=smem, size = 0x4, offset = 0x4, fixed_abs, tag = 'smem constant byte address 0x4 - core index']
  #allocation1 [shape = 'u32[72,128]{1,0:T(1,128)}', space=vmem, size = 0x9000, scoped, tag = 'internal scratch']
  #allocation2 [shape = 'f32[1]{0:T(128)S(6)}', space=smem, size = 0x200, scoped, tag = 'scoped memory for tpu_custom_call.1']
  %s0 = inlined_call_operand.hbm [shape: bf16[2,8,32], index: 0, kind: input, shape index: {}]
  %s1 = inlined_call_operand.vmem [shape: f32[2,8], index: 1, kind: input, shape index: {}]
  %s2 = inlined_call_operand.hbm [shape: bf16[32,32], index: 2, kind: input, shape index: {}]
  %s3 = inlined_call_operand.vmem [shape: f32[1,32], index: 3, kind: input, shape index: {}]
  %s4 = inlined_call_operand.vmem [shape: f32[1,32], index: 4, kind: input, shape index: {}]
  %s5 = inlined_call_operand.<no memory space> [shape: f32[1], index: 5, kind: input, shape index: {}]
  %s6 = inlined_call_operand.hbm [shape: bf16[2,32], index: 6, kind: output, shape index: {0}]
  %s7 = inlined_call_operand.hbm [shape: f32[2,8], index: 7, kind: output, shape index: {1}]
  %8 = xla_tuple %s6, %s7
  %s9 = sld [smem:[#allocation0]]
  $region50: #{tpu_custom_call.1} parent=0
    _
  %s11 = ssub.s32 1, %s9
  %s12 = scalar_select 0, %s11, %s9
  %13 = sst [smem:[#allocation2]] %s5
  $region1: #{tpu_custom_call.1} parent=0
    #allocation3 [shape = 'u8[4096]{0}', space=vmem, size = 0x1000, scoped, tag = 'input window, operand 0, single buffered']
    #allocation4 [shape = 's32[1]{0}', space=sflag, size = 0x4, scoped, tag = 'scoped memory for tpu_custom_call.1']
    #allocation5 [shape = 's32[1]{0}', space=sflag, size = 0x4, scoped, tag = 'scoped memory for tpu_custom_call.1']
    #allocation6 [shape = 'u8[8192]{0}', space=vmem, size = 0x2000, scoped, tag = 'input window, operand 2, single buffered']
    #allocation7 [shape = 's32[1]{0}', space=sflag, size = 0x4, scoped, tag = 'scoped memory for tpu_custom_call.1']
    #allocation8 [shape = 'u8[512]{0}', space=vmem, size = 0x400, scoped, tag = 'output window, operand 0, single buffered']
    #allocation9 [shape = 'u8[1024]{0}', space=vmem, size = 0x400, scoped, tag = 'output window, operand 1, single buffered']
    #allocation10 [shape = 's32[1]{0}', space=sflag, size = 0x4, scoped, tag = 'scoped memory for tpu_custom_call.1']
    %14 = vsyncpa [#allocation4], 0
    %15 = vsyncpa [#allocation7], 0
    %16 = vsyncpa [#allocation5], 0
    %17 = vsyncpa [#allocation10], 0
    // Predicated region
    $region2: #{tpu_custom_call.1} parent=1 // pred_check
      _
    $region3: #{tpu_custom_call.1} parent=1 // pred_check_branch
      %19 = sbr.rel (0) target = $region5
    $region4: #{tpu_custom_call.1} parent=1 // pred_region
      %21 = vsyncadd [#allocation4], 0
      %s22 = sshll.u32 %s0, 4
      %s23 = int_to_ptr.hbm [resolvable:$true] %s22
      %s24 = sshll.u32 [#allocation3], 4
      %s25 = int_to_ptr.vmem [resolvable:$true] %s24
      %30 = dma.hbm_to_vmem [thread:$0]  %s23, 128, %s25, [#allocation4], 64, 64, 4
    $region5: #{tpu_custom_call.1} parent=1 // pred_fallthru
      _
    // Predicated region
    $region6: #{tpu_custom_call.1} parent=1 // pred_check
      _
    $region7: #{tpu_custom_call.1} parent=1 // pred_check_branch
      %32 = sbr.rel (0) target = $region9
    $region8: #{tpu_custom_call.1} parent=1 // pred_region
      _
    $region9: #{tpu_custom_call.1} parent=1 // pred_fallthru
      _
    // Predicated region
    $region10: #{tpu_custom_call.1} parent=1 // pred_check
      _
    $region11: #{tpu_custom_call.1} parent=1 // pred_check_branch
      %34 = sbr.rel (0) target = $region13
    $region12: #{tpu_custom_call.1} parent=1 // pred_region
      %36 = vsyncadd [#allocation7], 0
      %s37 = sshll.u32 %s2, 4
      %s38 = int_to_ptr.hbm [resolvable:$true] %s37
      %s39 = sshll.u32 [#allocation6], 4
      %s40 = int_to_ptr.vmem [resolvable:$true] %s39
      %45 = dma.hbm_to_vmem [thread:$0]  %s38, 256, %s40, [#allocation7], 64, 64, 4
    $region13: #{tpu_custom_call.1} parent=1 // pred_fallthru
      _
    // Predicated region
    $region14: #{tpu_custom_call.1} parent=1 // pred_check
      _
    $region15: #{tpu_custom_call.1} parent=1 // pred_check_branch
      %47 = sbr.rel (0) target = $region17
    $region16: #{tpu_custom_call.1} parent=1 // pred_region
      _
    $region17: #{tpu_custom_call.1} parent=1 // pred_fallthru
      _
    // Predicated region
    $region18: #{tpu_custom_call.1} parent=1 // pred_check
      _
    $region19: #{tpu_custom_call.1} parent=1 // pred_check_branch
      %49 = sbr.rel (0) target = $region21
    $region20: #{tpu_custom_call.1} parent=1 // pred_region
      _
    $region21: #{tpu_custom_call.1} parent=1 // pred_fallthru
      _
    // Predicated region
    $region22: #{tpu_custom_call.1} parent=1 // pred_check
      _
    $region23: #{tpu_custom_call.1} parent=1 // pred_check_branch
      %51 = sbr.rel (0) target = $region25
    $region24: #{tpu_custom_call.1} parent=1 // pred_region
      _
    $region25: #{tpu_custom_call.1} parent=1 // pred_fallthru
      _
    // Predicated region
    $region26: #{tpu_custom_call.1} parent=1 // pred_check
      _
    $region27: #{tpu_custom_call.1} parent=1 // pred_check_branch
      %53 = sbr.rel (0) target = $region29
    $region28: #{tpu_custom_call.1} parent=1 // pred_region
      %55 = dma.done [#allocation4], 128
    $region29: #{tpu_custom_call.1} parent=1 // pred_fallthru
      _
    // Predicated region
    $region30: #{tpu_custom_call.1} parent=1 // pred_check
      _
    $region31: #{tpu_custom_call.1} parent=1 // pred_check_branch
      %57 = sbr.rel (0) target = $region33
    $region32: #{tpu_custom_call.1} parent=1 // pred_region
      %59 = dma.done [#allocation7], 256
    $region33: #{tpu_custom_call.1} parent=1 // pred_fallthru
      _
    %v61 = vld [vmem:[#allocation3] sm:$0xf]
    %v62 = vld [vmem:[#allocation3 + $0x4] sm:$0xf]
    %v63 = vld [vmem:[#allocation6] sm:$0xf]
    %v64 = vld [vmem:[#allocation6 + $0x4] sm:$0xf]
    %v65 = vld [vmem:[#allocation6 + $0x8] sm:$0xf]
    %v66 = vld [vmem:[#allocation6 + $0xc] sm:$0xf]
    %v67 = vld [vmem:[%s3] sm:$0x1]
    %v69 = vperm.slane %v67, 0
    %v73 = vunpack.c.l.b16 %v61
    %v74 = vunpack.c.l.b16 %v62
    %v75 = vpack.c.b16 %v74, %v73
    %v80 = vunpack.c.l.b16 %v63
    %v81 = vunpack.c.l.b16 %v64
    %v82 = vunpack.c.l.b16 %v65
    %v83 = vunpack.c.l.b16 %v66
    %v84 = vpack.c.b16 %v81, %v80
    %v85 = vpack.c.b16 %v83, %v82
    %vm88 = vcmask 261120
    %v90 = vsel %vm88, %v75, 0
    %92 = vmatpush.bf16.msra.mxu0 0
    %93 = vmatpush.bf16.msra.mxu0 0
    %94 = vmatpush.bf16.msra.mxu0 0
    %95 = vmatpush.bf16.msra.mxu0 0
    %96 = vmatpush.bf16.msra.mxu0 0
    %97 = vmatpush.bf16.msra.mxu0 0
    %98 = vmatpush.bf16.msra.mxu0 %v85
    %99 = vmatpush.bf16.msra.mxu0 %v84
    %100 = vmatmul.bf16.gmra.mxu0 %v90
    %v101 = vpop.f32.mrf.mxu0
    %v102 = vadd.f32 %v69, %v101
    %v103 = vpop.f32.mrf.mxu0
    %v104 = vadd.f32 %v69, %v103
    %105 = vdwg.mxu0
    %v106 = vmax.f32 %v102, 0.0
    %v107 = vmax.f32 %v104, 0.0
    %v108 = vld [vmem:[%s4] sm:$0x1]
    %v110 = vperm.slane %v108, 0
    %v112 = vmul.f32 %v106, %v110
    %v113 = vmul.f32 %v107, %v110
    %v114 = vsel %vm88, %v112, 0.0
    %115 = vadd.xlane.f32.xlu0 %v114
    %v116 = vpop.xlane.xlu0 %115
    %v117 = vsel %vm88, %v113, 0.0
    %118 = vadd.xlane.f32.xlu0 %v117
    %v119 = vpop.xlane.xlu0 %118
    %s120 = sld [smem:[#allocation2]]
    %v121 = vstv %s120
    %v122 = vadd.f32 %v116, %v121
    %v123 = vadd.f32 %v119, %v121
    %v124 = vld [vmem:[%s1] sm:$0x3]
    %v126 = vperm.slane %v124, 0
    %v127 = vlaneseq
    %v128 = vshrl.u32 %v127, 7
    %130 = vset.pattern.permute.xlu0 %v128
    %131 = vperm.xlu0 %130, %v126
    %v132 = vpop.permute.xlu0 %131
    %v133 = vperm.slane %v124, 1
    %v134 = vlaneseq
    %v135 = vshrl.u32 %v134, 7
    %137 = vset.pattern.permute.xlu0 %v135
    %138 = vperm.xlu0 %137, %v133
    %v139 = vpop.permute.xlu0 %138
    %v142 = vadd.f32 %v122, %v132
    %v143 = vadd.f32 %v123, %v139
    %146 = vset.pattern.permute.xlu0 0
    %147 = vperm.xlu0 %146, %v142
    %v148 = vpop.permute.xlu0 %147
    %149 = vset.pattern.permute.xlu0 0
    %150 = vperm.xlu0 %149, %v143
    %v151 = vpop.permute.xlu0 %150
    %v152 = vlaneseq
    %v153 = vand.u32 %v152, 127
    %v154 = vperm.slane %v148, %v153
    %v155 = vperm.slane %v151, %v153
    %vm156 = vcmask 1041409
    %v157 = vsel %vm156, %v155, %v154
    %vm159 = vcmask 58368
    %v160 = vsel %vm159, %v157, -inf
    %161 = vmax.xlane.f32.xlu0 %v160
    %v162 = vpop.xlane.xlu0 %161
    %v164 = vperm.slane %v162, 0
    %v165 = vperm.slane %v162, 1
    %v168 = vsub.f32 %v142, %v164
    %v169 = vsub.f32 %v143, %v165
    %v170 = vmul.f32 %v168, 1.442695
    %v171 = vpow.pop %v170
    %v172 = vmul.f32 %v169, 1.442695
    %v173 = vpow.pop %v172
    %176 = vset.pattern.permute.xlu0 0
    %177 = vperm.xlu0 %176, %v171
    %v178 = vpop.permute.xlu0 %177
    %179 = vset.pattern.permute.xlu0 0
    %180 = vperm.xlu0 %179, %v173
    %v181 = vpop.permute.xlu0 %180
    %v182 = vperm.slane %v178, %v153
    %v183 = vperm.slane %v181, %v153
    %v184 = vsel %vm156, %v183, %v182
    %v186 = vsel %vm159, %v184, 0.0
    %187 = vadd.xlane.f32.xlu0 %v186
    %v188 = vpop.xlane.xlu0 %187
    %v189 = vrcp.pop %v188
    %v190 = vmul.f32 %v188, %v189
    %v191 = vsub.f32 2.0, %v190
    %v192 = vmul.f32 %v189, %v191
    %v194 = vperm.slane %v192, 0
    %v195 = vperm.slane %v192, 1
    %v198 = vmul.f32 %v171, %v194
    %v199 = vmul.f32 %v173, %v195
    %202 = vset.pattern.permute.xlu0 0
    %203 = vperm.xlu0 %202, %v198
    %v204 = vpop.permute.xlu0 %203
    %205 = vset.pattern.permute.xlu0 0
    %206 = vperm.xlu0 %205, %v199
    %v207 = vpop.permute.xlu0 %206
    %v208 = vperm.slane %v204, %v153
    %v209 = vperm.slane %v207, %v153
    %v210 = vsel %vm156, %v209, %v208
    %212 = vst.msk [vmem:[#allocation9] sm:$0x3] %vm159, %v210
    %v213 = vunpack.c.l.bf16 %v61
    %v214 = vunpack.c.l.bf16 %v62
    %v217 = vmul.f32 %v204, %v213
    %v218 = vmul.f32 %v207, %v214
    %v219 = vsel %vm88, %v217, 0.0
    %v220 = vrot.slane %v219, 4
    %v221 = vadd.f32 %v219, %v220
    %v222 = vrot.slane %v221, 2
    %v223 = vadd.f32 %v221, %v222
    %v224 = vrot.slane %v223, 1
    %v225 = vadd.f32 %v223, %v224
    %v226 = vsel %vm88, %v218, 0.0
    %v227 = vrot.slane %v226, 4
    %v228 = vadd.f32 %v226, %v227
    %v229 = vrot.slane %v228, 2
    %v230 = vadd.f32 %v228, %v229
    %v231 = vrot.slane %v230, 1
    %v232 = vadd.f32 %v230, %v231
    %v233 = vpack.c.bf16 %v225, %v225
    %v234 = vpack.c.bf16 %v232, %v232
    %v237 = vrot.slane %v233, 3
    %v238 = vrot.slane %v234, 3
    %vm239 = vcmask 1040384
    %v242 = vsel %vm239, %v233, %v237
    %v245 = vsel %vm239, %v234, %v238
    %246 = vst [vmem:[#allocation1] ss:$4 sm:$0xff] %v242
    %v247 = vld [vmem:[#allocation1] sm:$0xff]
    %s249 = scalar_lea.vmem [#allocation1], 32
    %250 = vst [vmem:[%s249] ss:$4 sm:$0xff] %v245
    %v251 = vld [vmem:[#allocation1 + $0x20] sm:$0xff]
    %v253 = vunpack.c.l.b16 %v247
    %v254 = vunpack.c.l.b16 %v251
    %v255 = vrot.slane %v254, 7
    %v256 = vsel %vm156, %v255, %v253
    %v257 = vpack.c.b16 %v256, %v256
    %v258 = vrot.slane %v257, 3
    %v261 = vsel %vm239, %v257, %v258
    %vm263 = vcmask 253952
    %264 = vst.msk [vmem:[#allocation8] sm:$0x1] %vm263, %v261
    // Predicated region
    $region34: #{tpu_custom_call.1} parent=1 // pred_check
      _
    $region35: #{tpu_custom_call.1} parent=1 // pred_check_branch
      %266 = sbr.rel (0) target = $region37
    $region36: #{tpu_custom_call.1} parent=1 // pred_region
      %268 = vsyncadd [#allocation5], 0
      %s270 = sshll.u32 [#allocation8], 4
      %s271 = int_to_ptr.vmem [resolvable:$true] %s270
      %s272 = sshll.u32 %s6, 4
      %s273 = int_to_ptr.hbm [resolvable:$true] %s272
      %275 = dma.vmem_to_hbm [thread:$0]  %s271, 16, %s273, [#allocation5]
    $region37: #{tpu_custom_call.1} parent=1 // pred_fallthru
      _
    // Predicated region
    $region38: #{tpu_custom_call.1} parent=1 // pred_check
      _
    $region39: #{tpu_custom_call.1} parent=1 // pred_check_branch
      %277 = sbr.rel (0) target = $region41
    $region40: #{tpu_custom_call.1} parent=1 // pred_region
      %279 = vsyncadd [#allocation10], 0
      %s281 = sshll.u32 [#allocation9], 4
      %s282 = int_to_ptr.vmem [resolvable:$true] %s281
      %s283 = sshll.u32 %s7, 4
      %s284 = int_to_ptr.hbm [resolvable:$true] %s283
      %286 = dma.vmem_to_hbm [thread:$0]  %s282, 32, %s284, [#allocation10]
    $region41: #{tpu_custom_call.1} parent=1 // pred_fallthru
      _
    // Predicated region
    $region42: #{tpu_custom_call.1} parent=1 // pred_check
      _
    $region43: #{tpu_custom_call.1} parent=1 // pred_check_branch
      %288 = sbr.rel (0) target = $region45
    $region44: #{tpu_custom_call.1} parent=1 // pred_region
      %290 = dma.done [#allocation5], 16
    $region45: #{tpu_custom_call.1} parent=1 // pred_fallthru
      _
    // Predicated region
    $region46: #{tpu_custom_call.1} parent=1 // pred_check
      _
    $region47: #{tpu_custom_call.1} parent=1 // pred_check_branch
      %292 = sbr.rel (0) target = $region49
    $region48: #{tpu_custom_call.1} parent=1 // pred_region
      %294 = dma.done [#allocation10], 32
    $region49: #{tpu_custom_call.1} parent=1 // pred_fallthru
      _
    %295 = vsyncpa [#allocation4], 1
    %296 = vsyncpa [#allocation7], 1
    %297 = vsyncpa [#allocation5], 1
    %298 = vsyncpa [#allocation10], 1

</llo_original>
